<compile_context>
chip_gen: v7x
topology: tpu7x:2x2x1
jax: 0.10.0
libtpu: 0.0.40
codegen_flags: <defaults>
</compile_context>

<pallas_src>
import jax
import jax.numpy as jnp
from jax.experimental import pallas as pl
from jax.experimental.pallas import tpu as pltpu


LANE_WIDTH = 512  # lane-dense last dim (multiple of 128)


def _hswish_kernel(x_ref, o_ref):
    x = x_ref[...]
    dt = x.dtype
    y = (x
         * jnp.clip(x + jnp.asarray(3.0, dt),
                    jnp.asarray(0.0, dt), jnp.asarray(6.0, dt))
         * jnp.asarray(1.0 / 6.0, dt))
    o_ref[...] = y.astype(o_ref.dtype)


def _hswish_jnp(x):
    # Plain fused XLA elementwise path (used for ragged / tiny inputs).
    return x * jnp.clip(x + 3.0, 0.0, 6.0) * (1.0 / 6.0)


def _tpu_profile():
    """Per-generation tiling profile: (block bytes, scoped-VMEM limit, #TCs)."""
    try:
        kind = jax.devices()[0].device_kind.lower()
    except Exception:
        kind = ""
    if "v5" in kind:   # v5e/v5p: 16 MiB default scoped VMEM, per-step overhead already <10%
        return {"block_bytes": 2 << 20, "vmem_limit": None, "num_cores": 1}
    if "v6" in kind:   # v6e: 32 MiB default scoped VMEM -> 4 MiB blocks fit without a flag
        return {"block_bytes": 4 << 20, "vmem_limit": None, "num_cores": 1}
    if "7" in kind:    # v7x: 2 TCs/chip, 64 MiB physical VMEM, ~3.2 TB/s HBM
        return {"block_bytes": 8 << 20, "vmem_limit": 48 << 20, "num_cores": 2}
    # Unknown generation: conservative defaults that fit every scoped-VMEM budget.
    return {"block_bytes": 2 << 20, "vmem_limit": None, "num_cores": 1}


def hswish(x: jax.Array, *, min_pallas_bytes: int = 256 * 1024) -> jax.Array:
    """Elementwise hard-swish, matching x * relu6(x+3)/6 on any shape."""
    orig_shape = x.shape
    orig_dtype = x.dtype
    n = x.size
    if n == 0:
        return x

    itemsize = x.dtype.itemsize

    # Ragged (not a multiple of 512) or tiny inputs: the fused XLA elementwise
    # expression is one read + one write HBM pass; wrapping a pallas_call in
    # pad/slice (or a concat) would double traffic and add launch overhead.
    if (n % LANE_WIDTH != 0) or (n * itemsize < min_pallas_bytes):
        return _hswish_jnp(x)

    prof = _tpu_profile()
    block_bytes = prof["block_bytes"]
    vmem_limit = prof["vmem_limit"]
    num_cores = prof["num_cores"]

    sublane = max(8, 32 // itemsize)  # 8 for f32, 16 for bf16/f16, 32 for 1-byte dtypes
    rows = n // LANE_WIDTH
    x2d = x.reshape(rows, LANE_WIDTH)  # free layout-compatible reshape

    desired_rows = max(
        sublane, (block_bytes // (LANE_WIDTH * itemsize)) // sublane * sublane
    )
    if rows >= desired_rows:
        row_tile = desired_rows          # (sublane,128)-aligned; partial last block OK
    elif num_cores >= 2 and rows >= 2 * sublane:
        # Multi-TensorCore chip (v7x): guarantee >= 2 grid steps so the
        # "parallel" axis can shard across both cores.
        row_tile = ((pl.cdiv(rows, 2) + sublane - 1) // sublane) * sublane
    else:
        row_tile = rows                  # single full-extent block (always legal)

    grid = (pl.cdiv(rows, row_tile),)

    cp_kwargs = {"dimension_semantics": ("parallel",)}
    if vmem_limit is not None:
        cp_kwargs["vmem_limit_bytes"] = vmem_limit

    out2d = pl.pallas_call(
        _hswish_kernel,
        out_shape=jax.ShapeDtypeStruct((rows, LANE_WIDTH), orig_dtype),
        grid=grid,
        in_specs=[pl.BlockSpec((row_tile, LANE_WIDTH), lambda i: (i, 0))],
        out_specs=pl.BlockSpec((row_tile, LANE_WIDTH), lambda i: (i, 0)),
        compiler_params=pltpu.CompilerParams(**cp_kwargs),
        cost_estimate=pl.CostEstimate(
            flops=5 * n, transcendentals=0, bytes_accessed=2 * n * itemsize
        ),
    )(x2d)

    return out2d.reshape(orig_shape)


def _hswish_ref(x):
    return x * jnp.clip(x + 3.0, 0.0, 6.0) / 6.0


if __name__ == "__main__":
    key = jax.random.PRNGKey(0)
    k0, k1, k2, k3 = jax.random.split(key, 4)

    # 1) Small NCHW input consistent with a MobileNetV3 feature map, forced
    #    through the Pallas path so the kernel itself is exercised.
    x_small = jax.random.normal(k0, (2, 4, 16, 16), dtype=jnp.float32) * 4.0
    y_small = jax.block_until_ready(hswish(x_small, min_pallas_bytes=0))
    assert y_small.shape == x_small.shape and y_small.dtype == x_small.dtype
    assert jnp.allclose(y_small, _hswish_ref(x_small), atol=1e-5, rtol=1e-5)

    # 2) Realistic MobileNetV3 stem feature map -> auto-dispatch hits the
    #    Pallas path (multiple of 512 elements, > 256 KiB).
    x_fm = jax.random.normal(k1, (2, 16, 112, 112), dtype=jnp.float32) * 4.0
    y_fm = jax.block_until_ready(hswish(x_fm))
    assert jnp.allclose(y_fm, _hswish_ref(x_fm), atol=1e-5, rtol=1e-5)

    # 3) Larger map: exercises multiple grid steps and a partial last row-block.
    x_big = jax.random.normal(k2, (8, 32, 112, 112), dtype=jnp.float32) * 4.0
    y_big = jax.block_until_ready(hswish(x_big))
    assert jnp.allclose(y_big, _hswish_ref(x_big), atol=1e-5, rtol=1e-5)

    # 4) bf16 path (native low-precision compute, like PyTorch half Hardswish).
    x_bf = (jax.random.normal(k3, (2, 4, 16, 16), dtype=jnp.float32) * 4.0
            ).astype(jnp.bfloat16)
    y_bf = jax.block_until_ready(hswish(x_bf, min_pallas_bytes=0))
    y_bf_ref = _hswish_ref(x_bf.astype(jnp.float32)).astype(jnp.bfloat16)
    assert y_bf.dtype == jnp.bfloat16
    assert jnp.allclose(y_bf.astype(jnp.float32), y_bf_ref.astype(jnp.float32),
                        atol=0.05, rtol=0.05)

    # 5) Odd-sized input (not a multiple of 512): single-pass fused fallback,
    #    no pad/slice HBM traffic.
    x_odd = jax.random.normal(jax.random.PRNGKey(1), (3, 5, 7, 11),
                              dtype=jnp.float32) * 4.0
    y_odd = jax.block_until_ready(hswish(x_odd))
    assert y_odd.shape == x_odd.shape and y_odd.dtype == x_odd.dtype
    assert jnp.allclose(y_odd, _hswish_ref(x_odd), atol=1e-5, rtol=1e-5)

    print("KERNEL_OK")
</pallas_src>

<mosaic_0001>
module attributes {stable_mosaic.version = 11 : i64} {
  func.func @_hswish_kernel(%arg0: i32, %arg1: memref<4x512xf32, #tpu.memory_space<vmem>>, %arg2: memref<4x512xf32, #tpu.memory_space<vmem>>) attributes {dimension_semantics = [#tpu.dimension_semantics<parallel>], iteration_bounds = array<i64: 1>, scalar_prefetch = 0 : i64, scratch_operands = 0 : i64, tpu.core_type = #tpu.core_type<tc>, window_params = [{transform_indices = @transform_0, window_bounds = array<i64: 4, 512>}, {transform_indices = @transform_1, window_bounds = array<i64: 4, 512>}]} {
    %c0 = arith.constant 0 : index
    %c0_0 = arith.constant 0 : index
    %0 = vector.load %arg1[%c0, %c0_0] : memref<4x512xf32, #tpu.memory_space<vmem>>, vector<4x512xf32>
    %cst = arith.constant 3.000000e+00 : f32
    %1 = vector.broadcast %cst : f32 to vector<4x512xf32>
    %2 = arith.addf %0, %1 : vector<4x512xf32>
    %cst_1 = arith.constant 0.000000e+00 : f32
    %cst_2 = arith.constant 6.000000e+00 : f32
    %3 = vector.broadcast %cst_1 : f32 to vector<4x512xf32>
    %4 = arith.maximumf %3, %2 : vector<4x512xf32>
    %5 = vector.broadcast %cst_2 : f32 to vector<4x512xf32>
    %6 = arith.minimumf %5, %4 : vector<4x512xf32>
    %7 = arith.mulf %0, %6 : vector<4x512xf32>
    %cst_3 = arith.constant 0.166666672 : f32
    %8 = vector.broadcast %cst_3 : f32 to vector<4x512xf32>
    %9 = arith.mulf %7, %8 : vector<4x512xf32>
    %c0_4 = arith.constant 0 : index
    %c0_5 = arith.constant 0 : index
    %10 = vector.load %arg2[%c0_4, %c0_5] : memref<4x512xf32, #tpu.memory_space<vmem>>, vector<4x512xf32>
    tpu.vector_store %arg2[%c0_4, %c0_5], %9 {strides = array<i32>} : memref<4x512xf32, #tpu.memory_space<vmem>>, vector<4x512xf32>,
    return
  }
  func.func @transform_0(%arg0: i32) -> (i32, i32) {
    %c0_i32 = arith.constant 0 : i32
    %c0_i32_0 = arith.constant 0 : i32
    return %arg0, %c0_i32 : i32, i32
  }
  func.func @transform_1(%arg0: i32) -> (i32, i32) {
    %c0_i32 = arith.constant 0 : i32
    %c0_i32_0 = arith.constant 0 : i32
    return %arg0, %c0_i32 : i32, i32
  }
}

</mosaic_0001>

<llo_original>
// kernel: tpu_custom_call.1
$region0: #{tpu_custom_call.1}
  #allocation0 [shape = 'u32[]', space=smem, size = 0x4, offset = 0x4, fixed_abs, tag = 'smem constant byte address 0x4 - core index']
  #allocation1 [shape = 'u32[144,128]{1,0:T(1,128)}', space=vmem, size = 0x12000, scoped, tag = 'internal scratch']
  %s0 = inlined_call_operand.hbm [shape: f32[4,512], index: 0, kind: input, shape index: {}]
  %s1 = inlined_call_operand.hbm [shape: f32[4,512], index: 1, kind: output, shape index: {}]
  %s2 = sld [smem:[#allocation0]]
  $region18: #{tpu_custom_call.1} parent=0
    _
  %s4 = ssub.s32 1, %s2
  %s5 = scalar_select 0, %s4, %s2
  $region1: #{tpu_custom_call.1} parent=0
    #allocation2 [shape = 'u8[8192]{0}', space=vmem, size = 0x2000, scoped, tag = 'input window, operand 0, single buffered']
    #allocation3 [shape = 's32[1]{0}', space=sflag, size = 0x4, scoped, tag = 'scoped memory for tpu_custom_call.1']
    #allocation4 [shape = 's32[1]{0}', space=sflag, size = 0x4, scoped, tag = 'scoped memory for tpu_custom_call.1']
    #allocation5 [shape = 'u8[8192]{0}', space=vmem, size = 0x2000, scoped, tag = 'output window, operand 0, single buffered']
    %6 = vsyncpa [#allocation3], 0
    %7 = vsyncpa [#allocation4], 0
    // Predicated region
    $region2: #{tpu_custom_call.1} parent=1 // pred_check
      _
    $region3: #{tpu_custom_call.1} parent=1 // pred_check_branch
      %9 = sbr.rel (0) target = $region5
    $region4: #{tpu_custom_call.1} parent=1 // pred_region
      %s11 = ssub.s32 256, 256
      %12 = vsyncadd [#allocation3], %s11
      %s14 = sshll.u32 [#allocation2], 4
      %s15 = int_to_ptr.vmem [resolvable:$true] %s14
      %17 = dma.hbm_to_vmem [thread:$0]  %s0, 256, %s15, [#allocation3]
    $region5: #{tpu_custom_call.1} parent=1 // pred_fallthru
      _
    // Predicated region
    $region6: #{tpu_custom_call.1} parent=1 // pred_check
      _
    $region7: #{tpu_custom_call.1} parent=1 // pred_check_branch
      %19 = sbr.rel (0) target = $region9
    $region8: #{tpu_custom_call.1} parent=1 // pred_region
      %20 = dma.done [#allocation3], 256
    $region9: #{tpu_custom_call.1} parent=1 // pred_fallthru
      _
    %v21 = vld [vmem:[#allocation2] sm:$0xff]
    %v22 = vld [vmem:[#allocation2 + $0x8] sm:$0xff]
    %v23 = vadd.f32 %v21, 3.0
    %v24 = vadd.f32 %v22, 3.0
    %v25 = vmax.f32 %v23, 0.0
    %v26 = vmax.f32 %v24, 0.0
    %v27 = vmin.f32 %v25, 6.0
    %v28 = vmin.f32 %v26, 6.0
    %v29 = vmul.f32 %v21, %v27
    %v30 = vmul.f32 %v22, %v28
    %v31 = vmul.f32 %v29, 0.16666667
    %v32 = vmul.f32 %v30, 0.16666667
    %33 = vst [vmem:[#allocation5] sm:$0xff] %v31
    %34 = vst [vmem:[#allocation5 + $0x8] sm:$0xff] %v32
    // Predicated region
    $region10: #{tpu_custom_call.1} parent=1 // pred_check
      _
    $region11: #{tpu_custom_call.1} parent=1 // pred_check_branch
      %36 = sbr.rel (0) target = $region13
    $region12: #{tpu_custom_call.1} parent=1 // pred_region
      %s38 = ssub.s32 256, 256
      %39 = vsyncadd [#allocation4], %s38
      %s41 = sshll.u32 [#allocation5], 4
      %s42 = int_to_ptr.vmem [resolvable:$true] %s41
      %44 = dma.vmem_to_hbm [thread:$0]  %s42, 256, %s1, [#allocation4]
    $region13: #{tpu_custom_call.1} parent=1 // pred_fallthru
      _
    // Predicated region
    $region14: #{tpu_custom_call.1} parent=1 // pred_check
      _
    $region15: #{tpu_custom_call.1} parent=1 // pred_check_branch
      %46 = sbr.rel (0) target = $region17
    $region16: #{tpu_custom_call.1} parent=1 // pred_region
      %47 = dma.done [#allocation4], 256
    $region17: #{tpu_custom_call.1} parent=1 // pred_fallthru
      _
    %48 = vsyncpa [#allocation3], 1
    %49 = vsyncpa [#allocation4], 1

</llo_original>
